<compile_context>
chip_gen: v7x
topology: tpu7x:2x2x1
jax: 0.10.0
libtpu: 0.0.40
codegen_flags: <defaults>
</compile_context>

<pallas_src>
import jax
import jax.numpy as jnp
from jax import lax
from jax.experimental import pallas as pl
from jax.experimental.pallas import tpu as pltpu


# --------------------------------------------------------------------------
# Kernel: one batch tile (TM rows), all A heads fused, 128-row sub-tiling.
# --------------------------------------------------------------------------
def _make_arebm_kernel(sub_rows: int, n_sub: int, n_layers: int):
    """Build the kernel for a (TM = sub_rows * n_sub, O+A) batch tile."""

    def kernel(x_ref, w0_ref, b0_ref, wh_ref, bh_ref, wl_ref, bl_ref, out_ref):
        def sub_tile(r0):
            # First layer: one fused (O+A, A*H) matmul + bias + ReLU.
            x = x_ref[pl.ds(r0, sub_rows), :]
            h = jnp.dot(x, w0_ref[...], preferred_element_type=jnp.float32)
            h = jnp.maximum(h + b0_ref[...], 0.0)

            # Hidden MLP: L block-diagonal (A*H, A*H) layers, ReLU each.
            # L is small (4); static unroll inside one sub-tile is fine.
            for l in range(n_layers):
                h = jnp.dot(h.astype(wh_ref.dtype), wh_ref[l],
                            preferred_element_type=jnp.float32)
                h = jnp.maximum(h + bh_ref[pl.ds(l, 1), :], 0.0)

            # Last layer: block-diagonal (A*H, A) -> lane-contiguous (sub, A)
            # output block, no cross-lane reduction, no transpose.
            out = jnp.dot(h.astype(wl_ref.dtype), wl_ref[...],
                          preferred_element_type=jnp.float32) + bl_ref[...]
            out_ref[pl.ds(r0, sub_rows), :] = out.astype(out_ref.dtype)

        if n_sub == 1:
            sub_tile(0)
        else:
            # Inner 128-row sub-tile loop bounds activation live ranges when
            # TM > 128; unroll=True keeps full LLO scheduler visibility.
            def body(s, carry):
                sub_tile(pl.multiple_of(s * sub_rows, sub_rows))
                return carry

            lax.fori_loop(0, n_sub, body, 0, unroll=True)

    return kernel


# --------------------------------------------------------------------------
# Batch-tile heuristic.
# --------------------------------------------------------------------------
def _pick_batch_tile(batch: int) -> int:
    """Pick TM: the body is ~6 small MXU pushes, so the ~600-cycle grid-step
    overhead dominates -> use big tiles (up to 512 rows) while keeping >= 2
    grid steps so v7x's two TensorCores both get work. TM > 128 is always a
    multiple of 128 so the in-kernel 128-row sub-tile loop divides it exactly.
    """
    if batch <= 8:
        return batch                            # single full-dim block
    half = batch // 2
    if half >= 128:
        return min(512, (half // 128) * 128)    # multiple of 128, >= 2 steps
    return max(8, (half // 8) * 8)              # multiple of 8, <= 128


# --------------------------------------------------------------------------
# Fused block-diagonal weights (built ONCE at init, not per forward call).
# --------------------------------------------------------------------------
def build_fused_params(params, obs_shape, weight_dtype=jnp.bfloat16):
    """Stacked per-head params -> fused block-diagonal params.

    params: w0 (A, O+A, H), b0 (A, H), wh (A, L, H, H), bh (A, L, H),
            wl (A, H), bl (A,)
    """
    w0, b0, wh, bh, wl, bl = params
    A, _, H = w0.shape
    L = wh.shape[1]
    O = obs_shape
    AH = A * H

    # Head i only sees action[..., :i+1] -> zero "future" action rows r > i.
    # (Equivalent to input slicing for finite inputs; see header note.)
    head = jnp.arange(A)[:, None, None]
    row = jnp.arange(A)[None, :, None]
    w0_act = jnp.where(row <= head, w0[:, O:, :], 0.0)            # (A, A, H)
    w0_full = jnp.concatenate([w0[:, :O, :], w0_act], axis=1)     # (A, O+A, H)
    # Single fused first-layer weight (obs+action rows together): (O+A, A*H).
    w0_f = jnp.transpose(w0_full, (1, 0, 2)).reshape(O + A, AH)

    b0_f = b0.reshape(1, AH)

    # Hidden layers: block-diagonal (L, A*H, A*H).
    eye = jnp.eye(A, dtype=w0.dtype)
    wh_f = jnp.einsum('ab,alij->laibj', eye, wh).reshape(L, AH, AH)
    bh_f = jnp.transpose(bh, (1, 0, 2)).reshape(L, AH)

    # Last layer: block-diagonal columns (A*H, A).
    wl_f = jnp.einsum('ab,ai->aib', eye, wl).reshape(AH, A)
    bl_f = bl.reshape(1, A)

    return (w0_f.astype(weight_dtype), b0_f.astype(jnp.float32),
            wh_f.astype(weight_dtype), bh_f.astype(jnp.float32),
            wl_f.astype(weight_dtype), bl_f.astype(jnp.float32))


# --------------------------------------------------------------------------
# Forward wrapper (takes pre-built fused weights).
# --------------------------------------------------------------------------
def arebm_forward_fused(obs, action, fused):
    """obs: (B, O) f32, action: (B, A) f32 -> (B, A) f32."""
    w0f, b0f, whf, bhf, wlf, blf = fused
    batch = obs.shape[0]
    n_act = action.shape[-1]
    d_in, n_lanes = w0f.shape                  # O+A, A*H
    n_layers = whf.shape[0]

    # Merge the two first-layer operands once in the wrapper -> one MXU push.
    x = jnp.concatenate([obs, action], axis=-1).astype(jnp.bfloat16)

    tm = _pick_batch_tile(batch)
    n_tiles = pl.cdiv(batch, tm)
    padded = n_tiles * tm
    if padded != batch:                        # ragged batch: zero-pad rows
        x = jnp.pad(x, ((0, padded - batch), (0, 0)))

    sub_rows = min(tm, 128)
    n_sub = tm // sub_rows

    out = pl.pallas_call(
        _make_arebm_kernel(sub_rows, n_sub, n_layers),
        out_shape=jax.ShapeDtypeStruct((padded, n_act), jnp.float32),
        grid_spec=pltpu.PrefetchScalarGridSpec(
            num_scalar_prefetch=0,
            grid=(n_tiles,),
            in_specs=[
                pl.BlockSpec((tm, d_in), lambda b: (b, 0)),          # x tile
                # Weights/biases: constant index_map -> resident in VMEM.
                # (Double-buffering them costs only ~0.27 MiB total, far
                #  below even v7x's 64 MiB VMEM, so no Buffered(1) needed.)
                pl.BlockSpec((d_in, n_lanes), lambda b: (0, 0)),     # W0 fused
                pl.BlockSpec((1, n_lanes), lambda b: (0, 0)),        # b0
                pl.BlockSpec((n_layers, n_lanes, n_lanes),
                             lambda b: (0, 0, 0)),                   # hidden Ws
                pl.BlockSpec((n_layers, n_lanes), lambda b: (0, 0)),  # hidden bs
                pl.BlockSpec((n_lanes, n_act), lambda b: (0, 0)),    # last W
                pl.BlockSpec((1, n_act), lambda b: (0, 0)),          # last b
            ],
            out_specs=pl.BlockSpec((tm, n_act), lambda b: (b, 0)),   # disjoint
        ),
        compiler_params=pltpu.CompilerParams(
            dimension_semantics=("parallel",),   # batch tiles -> v7x 2 TCs
        ),
    )(x, w0f, b0f, whf, bhf, wlf, blf)

    return out[:batch]                           # drop padded rows (no-op if exact)


def make_arebm_forward(params, obs_shape):
    """Hoist fused-weight construction out of the per-call path: build the
    block-diagonal bf16 weights once and return a jitted forward(obs, action)."""
    fused = build_fused_params(params, obs_shape)

    @jax.jit
    def forward(obs, action):
        return arebm_forward_fused(obs, action, fused)

    return forward


# --------------------------------------------------------------------------
# Synthetic params + pure-JAX f32 reference (PyTorch module semantics).
# --------------------------------------------------------------------------
def init_params(key, obs_shape, action_shape, hidden_size, hidden_layer_num):
    A, H, L = action_shape, hidden_size, hidden_layer_num
    D = obs_shape + action_shape
    k = jax.random.split(key, 6)
    w0 = 0.1 * jax.random.normal(k[0], (A, D, H), jnp.float32)
    b0 = 0.1 * jax.random.normal(k[1], (A, H), jnp.float32)
    wh = 0.1 * jax.random.normal(k[2], (A, L, H, H), jnp.float32)
    bh = 0.1 * jax.random.normal(k[3], (A, L, H), jnp.float32)
    wl = 0.1 * jax.random.normal(k[4], (A, H), jnp.float32)
    bl = 0.1 * jax.random.normal(k[5], (A,), jnp.float32)
    return (w0, b0, wh, bh, wl, bl)


def reference_forward(obs, action, params):
    """Exact f32 reference: EBM_i sees concat([obs, action[..., :i+1]])."""
    w0, b0, wh, bh, wl, bl = params
    O = obs.shape[-1]
    A = action.shape[-1]
    L = wh.shape[1]
    outs = []
    for i in range(A):
        xi = jnp.concatenate([obs, action[:, :i + 1]], axis=-1)
        h = jax.nn.relu(xi @ w0[i, :O + i + 1] + b0[i])
        for l in range(L):
            h = jax.nn.relu(h @ wh[i, l] + bh[i, l])
        outs.append(h @ wl[i] + bl[i])                            # Linear(H->1).squeeze(-1)
    return jnp.stack(outs, axis=-1)                               # (B, A)


if __name__ == "__main__":
    # Small shapes consistent with the module; A*H = 128 lanes (one vreg row).
    OBS, ACT, HID, NLAYER = 16, 4, 32, 4

    key = jax.random.PRNGKey(0)
    k_par, k_data = jax.random.split(key)
    params = init_params(k_par, OBS, ACT, HID, NLAYER)

    forward = make_arebm_forward(params, OBS)     # fused weights built once

    # Cover: single-tile path (B=8), ragged/zero-padded multi-tile path
    # (B=200 -> TM=96, 3 tiles), and TM=256 > 128 with the inner 128-row
    # sub-tile loop and a 2-step "parallel" grid (B=512).
    for batch in (8, 200, 512):
        kb = jax.random.fold_in(k_data, batch)
        ko, ka = jax.random.split(kb)
        obs = jax.random.normal(ko, (batch, OBS), jnp.float32)
        action = jax.random.normal(ka, (batch, ACT), jnp.float32)

        out = jax.block_until_ready(forward(obs, action))
        ref = reference_forward(obs, action, params)

        assert out.shape == (batch, ACT), out.shape
        # bf16 matmuls vs f32 reference -> loosened tolerance.
        assert jnp.allclose(out, ref, atol=5e-2, rtol=5e-2), (
            f"mismatch vs reference at batch={batch}")

    print("KERNEL_OK")
</pallas_src>

<mosaic_0001>
module attributes {stable_mosaic.version = 11 : i64} {
  func.func @kernel(%arg0: i32, %arg1: memref<8x20xbf16, #tpu.memory_space<vmem>>, %arg2: memref<20x128xbf16, #tpu.memory_space<vmem>>, %arg3: memref<1x128xf32, #tpu.memory_space<vmem>>, %arg4: memref<4x128x128xbf16, #tpu.memory_space<vmem>>, %arg5: memref<4x128xf32, #tpu.memory_space<vmem>>, %arg6: memref<128x4xbf16, #tpu.memory_space<vmem>>, %arg7: memref<1x4xf32, #tpu.memory_space<vmem>>, %arg8: memref<8x4xf32, #tpu.memory_space<vmem>>) attributes {dimension_semantics = [#tpu.dimension_semantics<parallel>], iteration_bounds = array<i64: 1>, scalar_prefetch = 0 : i64, scratch_operands = 0 : i64, tpu.core_type = #tpu.core_type<tc>, window_params = [{transform_indices = @transform_0, window_bounds = array<i64: 8, 20>}, {pipeline_mode = #tpu.pipeline_mode<synchronous>, transform_indices = @transform_1, window_bounds = array<i64: 20, 128>}, {pipeline_mode = #tpu.pipeline_mode<synchronous>, transform_indices = @transform_2, window_bounds = array<i64: 1, 128>}, {pipeline_mode = #tpu.pipeline_mode<synchronous>, transform_indices = @transform_3, window_bounds = array<i64: 4, 128, 128>}, {pipeline_mode = #tpu.pipeline_mode<synchronous>, transform_indices = @transform_4, window_bounds = array<i64: 4, 128>}, {pipeline_mode = #tpu.pipeline_mode<synchronous>, transform_indices = @transform_5, window_bounds = array<i64: 128, 4>}, {pipeline_mode = #tpu.pipeline_mode<synchronous>, transform_indices = @transform_6, window_bounds = array<i64: 1, 4>}, {transform_indices = @transform_7, window_bounds = array<i64: 8, 4>}]} {
    %c0 = arith.constant 0 : index
    %c0_0 = arith.constant 0 : index
    %0 = vector.load %arg1[%c0, %c0_0] : memref<8x20xbf16, #tpu.memory_space<vmem>>, vector<8x20xbf16>
    %c0_1 = arith.constant 0 : index
    %c0_2 = arith.constant 0 : index
    %1 = vector.load %arg2[%c0_1, %c0_2] : memref<20x128xbf16, #tpu.memory_space<vmem>>, vector<20x128xbf16>
    %cst = arith.constant dense<0.000000e+00> : vector<8x128xf32>
    %2 = tpu.matmul %0, %1, %cst {dimension_numbers = #tpu.dot_dimension_numbers<[1], [0], [0], [1], [0, 0, 1, 1], [], []>} : vector<8x20xbf16>, vector<20x128xbf16>, vector<8x128xf32> -> vector<8x128xf32>
    %c0_3 = arith.constant 0 : index
    %c0_4 = arith.constant 0 : index
    %3 = vector.load %arg3[%c0_3, %c0_4] : memref<1x128xf32, #tpu.memory_space<vmem>>, vector<1x128xf32>
    %4 = vector.broadcast %3 : vector<1x128xf32> to vector<8x128xf32>
    %5 = arith.addf %2, %4 : vector<8x128xf32>
    %cst_5 = arith.constant 0.000000e+00 : f32
    %6 = vector.broadcast %cst_5 : f32 to vector<8x128xf32>
    %7 = arith.maximumf %5, %6 : vector<8x128xf32>
    %8 = arith.truncf %7 : vector<8x128xf32> to vector<8x128xbf16>
    %c0_6 = arith.constant 0 : index
    %c0_7 = arith.constant 0 : index
    %c0_8 = arith.constant 0 : index
    %9 = vector.load %arg4[%c0_6, %c0_7, %c0_8] : memref<4x128x128xbf16, #tpu.memory_space<vmem>>, vector<1x128x128xbf16>
    %10 = vector.shape_cast %9 : vector<1x128x128xbf16> to vector<128x128xbf16>
    %cst_9 = arith.constant dense<0.000000e+00> : vector<8x128xf32>
    %11 = tpu.matmul %8, %10, %cst_9 {dimension_numbers = #tpu.dot_dimension_numbers<[1], [0], [0], [1], [0, 0, 1, 1], [], []>} : vector<8x128xbf16>, vector<128x128xbf16>, vector<8x128xf32> -> vector<8x128xf32>
    %c0_10 = arith.constant 0 : index
    %c0_11 = arith.constant 0 : index
    %12 = vector.load %arg5[%c0_10, %c0_11] : memref<4x128xf32, #tpu.memory_space<vmem>>, vector<1x128xf32>
    %13 = vector.broadcast %12 : vector<1x128xf32> to vector<8x128xf32>
    %14 = arith.addf %11, %13 : vector<8x128xf32>
    %cst_12 = arith.constant 0.000000e+00 : f32
    %15 = vector.broadcast %cst_12 : f32 to vector<8x128xf32>
    %16 = arith.maximumf %14, %15 : vector<8x128xf32>
    %17 = arith.truncf %16 : vector<8x128xf32> to vector<8x128xbf16>
    %c1 = arith.constant 1 : index
    %c0_13 = arith.constant 0 : index
    %c0_14 = arith.constant 0 : index
    %18 = vector.load %arg4[%c1, %c0_13, %c0_14] : memref<4x128x128xbf16, #tpu.memory_space<vmem>>, vector<1x128x128xbf16>
    %19 = vector.shape_cast %18 : vector<1x128x128xbf16> to vector<128x128xbf16>
    %cst_15 = arith.constant dense<0.000000e+00> : vector<8x128xf32>
    %20 = tpu.matmul %17, %19, %cst_15 {dimension_numbers = #tpu.dot_dimension_numbers<[1], [0], [0], [1], [0, 0, 1, 1], [], []>} : vector<8x128xbf16>, vector<128x128xbf16>, vector<8x128xf32> -> vector<8x128xf32>
    %c1_16 = arith.constant 1 : index
    %c0_17 = arith.constant 0 : index
    %21 = vector.load %arg5[%c1_16, %c0_17] : memref<4x128xf32, #tpu.memory_space<vmem>>, vector<1x128xf32>
    %22 = vector.broadcast %21 : vector<1x128xf32> to vector<8x128xf32>
    %23 = arith.addf %20, %22 : vector<8x128xf32>
    %cst_18 = arith.constant 0.000000e+00 : f32
    %24 = vector.broadcast %cst_18 : f32 to vector<8x128xf32>
    %25 = arith.maximumf %23, %24 : vector<8x128xf32>
    %26 = arith.truncf %25 : vector<8x128xf32> to vector<8x128xbf16>
    %c2 = arith.constant 2 : index
    %c0_19 = arith.constant 0 : index
    %c0_20 = arith.constant 0 : index
    %27 = vector.load %arg4[%c2, %c0_19, %c0_20] : memref<4x128x128xbf16, #tpu.memory_space<vmem>>, vector<1x128x128xbf16>
    %28 = vector.shape_cast %27 : vector<1x128x128xbf16> to vector<128x128xbf16>
    %cst_21 = arith.constant dense<0.000000e+00> : vector<8x128xf32>
    %29 = tpu.matmul %26, %28, %cst_21 {dimension_numbers = #tpu.dot_dimension_numbers<[1], [0], [0], [1], [0, 0, 1, 1], [], []>} : vector<8x128xbf16>, vector<128x128xbf16>, vector<8x128xf32> -> vector<8x128xf32>
    %c2_22 = arith.constant 2 : index
    %c0_23 = arith.constant 0 : index
    %30 = vector.load %arg5[%c2_22, %c0_23] : memref<4x128xf32, #tpu.memory_space<vmem>>, vector<1x128xf32>
    %31 = vector.broadcast %30 : vector<1x128xf32> to vector<8x128xf32>
    %32 = arith.addf %29, %31 : vector<8x128xf32>
    %cst_24 = arith.constant 0.000000e+00 : f32
    %33 = vector.broadcast %cst_24 : f32 to vector<8x128xf32>
    %34 = arith.maximumf %32, %33 : vector<8x128xf32>
    %35 = arith.truncf %34 : vector<8x128xf32> to vector<8x128xbf16>
    %c3 = arith.constant 3 : index
    %c0_25 = arith.constant 0 : index
    %c0_26 = arith.constant 0 : index
    %36 = vector.load %arg4[%c3, %c0_25, %c0_26] : memref<4x128x128xbf16, #tpu.memory_space<vmem>>, vector<1x128x128xbf16>
    %37 = vector.shape_cast %36 : vector<1x128x128xbf16> to vector<128x128xbf16>
    %cst_27 = arith.constant dense<0.000000e+00> : vector<8x128xf32>
    %38 = tpu.matmul %35, %37, %cst_27 {dimension_numbers = #tpu.dot_dimension_numbers<[1], [0], [0], [1], [0, 0, 1, 1], [], []>} : vector<8x128xbf16>, vector<128x128xbf16>, vector<8x128xf32> -> vector<8x128xf32>
    %c3_28 = arith.constant 3 : index
    %c0_29 = arith.constant 0 : index
    %39 = vector.load %arg5[%c3_28, %c0_29] : memref<4x128xf32, #tpu.memory_space<vmem>>, vector<1x128xf32>
    %40 = vector.broadcast %39 : vector<1x128xf32> to vector<8x128xf32>
    %41 = arith.addf %38, %40 : vector<8x128xf32>
    %cst_30 = arith.constant 0.000000e+00 : f32
    %42 = vector.broadcast %cst_30 : f32 to vector<8x128xf32>
    %43 = arith.maximumf %41, %42 : vector<8x128xf32>
    %44 = arith.truncf %43 : vector<8x128xf32> to vector<8x128xbf16>
    %c0_31 = arith.constant 0 : index
    %c0_32 = arith.constant 0 : index
    %45 = vector.load %arg6[%c0_31, %c0_32] : memref<128x4xbf16, #tpu.memory_space<vmem>>, vector<128x4xbf16>
    %cst_33 = arith.constant dense<0.000000e+00> : vector<8x4xf32>
    %46 = tpu.matmul %44, %45, %cst_33 {dimension_numbers = #tpu.dot_dimension_numbers<[1], [0], [0], [1], [0, 0, 1, 1], [], []>} : vector<8x128xbf16>, vector<128x4xbf16>, vector<8x4xf32> -> vector<8x4xf32>
    %c0_34 = arith.constant 0 : index
    %c0_35 = arith.constant 0 : index
    %47 = vector.load %arg7[%c0_34, %c0_35] : memref<1x4xf32, #tpu.memory_space<vmem>>, vector<1x4xf32>
    %48 = vector.broadcast %47 : vector<1x4xf32> to vector<8x4xf32>
    %49 = arith.addf %46, %48 : vector<8x4xf32>
    %c0_36 = arith.constant 0 : index
    %c0_37 = arith.constant 0 : index
    %50 = vector.load %arg8[%c0_36, %c0_37] : memref<8x4xf32, #tpu.memory_space<vmem>>, vector<8x4xf32>
    tpu.vector_store %arg8[%c0_36, %c0_37], %49 {strides = array<i32>} : memref<8x4xf32, #tpu.memory_space<vmem>>, vector<8x4xf32>,
    return
  }
  func.func @transform_0(%arg0: i32) -> (i32, i32) {
    %c0_i32 = arith.constant 0 : i32
    %c0_i32_0 = arith.constant 0 : i32
    return %arg0, %c0_i32 : i32, i32
  }
  func.func @transform_1(%arg0: i32) -> (i32, i32) {
    %c0_i32 = arith.constant 0 : i32
    %c0_i32_0 = arith.constant 0 : i32
    %c0_i32_1 = arith.constant 0 : i32
    return %c0_i32, %c0_i32_0 : i32, i32
  }
  func.func @transform_2(%arg0: i32) -> (i32, i32) {
    %c0_i32 = arith.constant 0 : i32
    %c0_i32_0 = arith.constant 0 : i32
    %c0_i32_1 = arith.constant 0 : i32
    return %c0_i32, %c0_i32_0 : i32, i32
  }
  func.func @transform_3(%arg0: i32) -> (i32, i32, i32) {
    %c0_i32 = arith.constant 0 : i32
    %c0_i32_0 = arith.constant 0 : i32
    %c0_i32_1 = arith.constant 0 : i32
    %c0_i32_2 = arith.constant 0 : i32
    return %c0_i32, %c0_i32_0, %c0_i32_1 : i32, i32, i32
  }
  func.func @transform_4(%arg0: i32) -> (i32, i32) {
    %c0_i32 = arith.constant 0 : i32
    %c0_i32_0 = arith.constant 0 : i32
    %c0_i32_1 = arith.constant 0 : i32
    return %c0_i32, %c0_i32_0 : i32, i32
  }
  func.func @transform_5(%arg0: i32) -> (i32, i32) {
    %c0_i32 = arith.constant 0 : i32
    %c0_i32_0 = arith.constant 0 : i32
    %c0_i32_1 = arith.constant 0 : i32
    return %c0_i32, %c0_i32_0 : i32, i32
  }
  func.func @transform_6(%arg0: i32) -> (i32, i32) {
    %c0_i32 = arith.constant 0 : i32
    %c0_i32_0 = arith.constant 0 : i32
    %c0_i32_1 = arith.constant 0 : i32
    return %c0_i32, %c0_i32_0 : i32, i32
  }
  func.func @transform_7(%arg0: i32) -> (i32, i32) {
    %c0_i32 = arith.constant 0 : i32
    %c0_i32_0 = arith.constant 0 : i32
    return %arg0, %c0_i32 : i32, i32
  }
}

</mosaic_0001>

<llo_original>
// kernel: forward.1
$region0: #{forward.1}
  #allocation0 [shape = 'u32[]', space=smem, size = 0x4, offset = 0x4, fixed_abs, tag = 'smem constant byte address 0x4 - core index']
  #allocation1 [shape = 'u32[144,128]{1,0:T(1,128)}', space=vmem, size = 0x12000, scoped, tag = 'internal scratch']
  %s0 = inlined_call_operand.vmem [shape: bf16[8,20], index: 0, kind: input, shape index: {}]
  %s1 = inlined_call_operand.hbm [shape: bf16[20,128], index: 1, kind: input, shape index: {}]
  %s2 = inlined_call_operand.vmem [shape: f32[1,128], index: 2, kind: input, shape index: {}]
  %s3 = inlined_call_operand.hbm [shape: bf16[4,128,128], index: 3, kind: input, shape index: {}]
  %s4 = inlined_call_operand.vmem [shape: f32[4,128], index: 4, kind: input, shape index: {}]
  %s5 = inlined_call_operand.vmem [shape: bf16[128,4], index: 5, kind: input, shape index: {}]
  %s6 = inlined_call_operand.vmem [shape: f32[1,4], index: 6, kind: input, shape index: {}]
  %s7 = inlined_call_operand.vmem [shape: f32[8,4], index: 7, kind: output, shape index: {}]
  %s8 = sld [smem:[#allocation0]]
  $region46: #{forward.1} parent=0
    _
  %s10 = ssub.s32 1, %s8
  %s11 = scalar_select 0, %s10, %s8
  $region1: #{forward.1} parent=0
    #allocation2 [shape = 'u8[6144]{0}', space=vmem, size = 0x1800, scoped, tag = 'input window, operand 1, single buffered']
    #allocation3 [shape = 's32[1]{0}', space=sflag, size = 0x4, scoped, tag = 'scoped memory for forward.1']
    #allocation4 [shape = 'u8[131072]{0}', space=vmem, size = 0x20000, scoped, tag = 'input window, operand 3, single buffered']
    #allocation5 [shape = 's32[1]{0}', space=sflag, size = 0x4, scoped, tag = 'scoped memory for forward.1']
    %12 = vsyncpa [#allocation3], 0
    %13 = vsyncpa [#allocation5], 0
    // Predicated region
    $region2: #{forward.1} parent=1 // pred_check
      _
    $region3: #{forward.1} parent=1 // pred_check_branch
      %15 = sbr.rel (0) target = $region5
    $region4: #{forward.1} parent=1 // pred_region
      _
    $region5: #{forward.1} parent=1 // pred_fallthru
      _
    // Predicated region
    $region6: #{forward.1} parent=1 // pred_check
      _
    $region7: #{forward.1} parent=1 // pred_check_branch
      %17 = sbr.rel (0) target = $region9
    $region8: #{forward.1} parent=1 // pred_region
      %s19 = ssub.s32 192, 192
      %20 = vsyncadd [#allocation3], %s19
      %s21 = sshll.u32 [#allocation2], 4
      %s22 = int_to_ptr.vmem [resolvable:$true] %s21
      %27 = dma.hbm_to_vmem [thread:$0]  %s1, 192, %s22, [#allocation3], 64, 64, 4
    $region9: #{forward.1} parent=1 // pred_fallthru
      _
    // Predicated region
    $region10: #{forward.1} parent=1 // pred_check
      _
    $region11: #{forward.1} parent=1 // pred_check_branch
      %29 = sbr.rel (0) target = $region13
    $region12: #{forward.1} parent=1 // pred_region
      _
    $region13: #{forward.1} parent=1 // pred_fallthru
      _
    // Predicated region
    $region14: #{forward.1} parent=1 // pred_check
      _
    $region15: #{forward.1} parent=1 // pred_check_branch
      %31 = sbr.rel (0) target = $region17
    $region16: #{forward.1} parent=1 // pred_region
      %s33 = ssub.s32 4096, 4096
      %34 = vsyncadd [#allocation5], %s33
      %s35 = sshll.u32 [#allocation4], 4
      %s36 = int_to_ptr.vmem [resolvable:$true] %s35
      %41 = dma.hbm_to_vmem [thread:$0]  %s3, 4096, %s36, [#allocation5], 64, 64, 4
    $region17: #{forward.1} parent=1 // pred_fallthru
      _
    // Predicated region
    $region18: #{forward.1} parent=1 // pred_check
      _
    $region19: #{forward.1} parent=1 // pred_check_branch
      %43 = sbr.rel (0) target = $region21
    $region20: #{forward.1} parent=1 // pred_region
      _
    $region21: #{forward.1} parent=1 // pred_fallthru
      _
    // Predicated region
    $region22: #{forward.1} parent=1 // pred_check
      _
    $region23: #{forward.1} parent=1 // pred_check_branch
      %45 = sbr.rel (0) target = $region25
    $region24: #{forward.1} parent=1 // pred_region
      _
    $region25: #{forward.1} parent=1 // pred_fallthru
      _
    // Predicated region
    $region26: #{forward.1} parent=1 // pred_check
      _
    $region27: #{forward.1} parent=1 // pred_check_branch
      %47 = sbr.rel (0) target = $region29
    $region28: #{forward.1} parent=1 // pred_region
      _
    $region29: #{forward.1} parent=1 // pred_fallthru
      _
    // Predicated region
    $region30: #{forward.1} parent=1 // pred_check
      _
    $region31: #{forward.1} parent=1 // pred_check_branch
      %49 = sbr.rel (0) target = $region33
    $region32: #{forward.1} parent=1 // pred_region
      %50 = dma.done [#allocation3], 192
    $region33: #{forward.1} parent=1 // pred_fallthru
      _
    // Predicated region
    $region34: #{forward.1} parent=1 // pred_check
      _
    $region35: #{forward.1} parent=1 // pred_check_branch
      %52 = sbr.rel (0) target = $region37
    $region36: #{forward.1} parent=1 // pred_region
      %53 = dma.done [#allocation5], 4096
    $region37: #{forward.1} parent=1 // pred_fallthru
      _
    %v55 = vld [vmem:[%s0] sm:$0xf]
    %v56 = vld [vmem:[#allocation2] sm:$0xf]
    %v57 = vld [vmem:[#allocation2 + $0x4] sm:$0xf]
    %v58 = vld [vmem:[#allocation2 + $0x8] sm:$0x3]
    %v59 = vld [vmem:[%s2] sm:$0x1]
    %v61 = vlaneseq
    %v62 = vshrl.u32 %v61, 7
    %v63 = vsub.s32 0, %v62
    %v64 = vrot.slane %v59, %v63
    %v69 = vunpack.c.l.b16 %v56
    %v70 = vunpack.c.l.b16 %v57
    %v71 = vunpack.c.l.b16 %v58
    %v72 = vpack.c.b16 %v70, %v69
    %v73 = vpack.c.b16 %v71, %v71
    %vm75 = vcmask 162816
    %v77 = vsel %vm75, %v55, 0
    %vm79 = vcmask 1041408
    %v81 = vsel %vm79, %v73, 0
    %83 = vmatprep.subr.bf16.mxu0 0
    %84 = vmatpush1.bf16.msra.mxu0 %v72
    %85 = vmatprep.subr.bf16.mxu0 0
    %86 = vmatpush1.bf16.msra.mxu0 %v81
    %87 = vmatprep.subr.bf16.mxu0 0
    %88 = vmatpush1.bf16.msra.mxu0 0
    %89 = vmatprep.subr.bf16.mxu0 0
    %90 = vmatpush1.bf16.msra.mxu0 0
    %91 = vmatprep.subr.bf16.mxu0 0
    %92 = vmatpush1.bf16.msra.mxu0 0
    %93 = vmatprep.subr.bf16.mxu0 0
    %94 = vmatpush1.bf16.msra.mxu0 0
    %95 = vmatprep.subr.bf16.mxu0 0
    %96 = vmatpush1.bf16.msra.mxu0 0
    %97 = vmatprep.subr.bf16.mxu0 0
    %98 = vmatpush1.bf16.msra.mxu0 0
    %99 = vmatprep.subr.bf16.mxu0 0
    %100 = vmatpush1.bf16.msra.mxu0 0
    %101 = vmatprep.subr.bf16.mxu0 0
    %102 = vmatpush1.bf16.msra.mxu0 0
    %103 = vmatprep.subr.bf16.mxu0 0
    %104 = vmatpush1.bf16.msra.mxu0 0
    %105 = vmatprep.subr.bf16.mxu0 0
    %106 = vmatpush1.bf16.msra.mxu0 0
    %107 = vmatprep.subr.bf16.mxu0 0
    %108 = vmatpush1.bf16.msra.mxu0 0
    %109 = vmatprep.subr.bf16.mxu0 0
    %110 = vmatpush1.bf16.msra.mxu0 0
    %111 = vmatprep.subr.bf16.mxu0 0
    %112 = vmatpush1.bf16.msra.mxu0 0
    %113 = vmatprep.subr.bf16.mxu0 0
    %114 = vmatpush1.bf16.msra.mxu0 0
    %115 = vmatprep.mubr.bf16.mxu0 0
    %116 = vmatmul.mubr.bf16.gmra.mrb[0].mxu0 %v77
    %v117 = vpop.f32.mrb[0].mxu0
    %v118 = vadd.f32 %v64, %v117
    %v119 = vpop.f32.mrb[0].mxu0
    %v120 = vpop.f32.mrb[0].mxu0
    %v121 = vpop.f32.mrb[0].mxu0
    %122 = vdwg.mxu0
    %v123 = vmax.f32 %v118, 0.0
    %v124 = vpack.c.bf16 %v123, %v123
    %v125 = vld [vmem:[#allocation4] sm:$0xf]
    %v126 = vld [vmem:[#allocation4 + $0x4] sm:$0xf]
    %v127 = vld [vmem:[#allocation4 + $0x8] sm:$0xf]
    %v128 = vld [vmem:[#allocation4 + $0xc] sm:$0xf]
    %v129 = vld [vmem:[#allocation4 + $0x10] sm:$0xf]
    %v130 = vld [vmem:[#allocation4 + $0x14] sm:$0xf]
    %v131 = vld [vmem:[#allocation4 + $0x18] sm:$0xf]
    %v132 = vld [vmem:[#allocation4 + $0x1c] sm:$0xf]
    %v133 = vld [vmem:[#allocation4 + $0x20] sm:$0xf]
    %v134 = vld [vmem:[#allocation4 + $0x24] sm:$0xf]
    %v135 = vld [vmem:[#allocation4 + $0x28] sm:$0xf]
    %v136 = vld [vmem:[#allocation4 + $0x2c] sm:$0xf]
    %v137 = vld [vmem:[#allocation4 + $0x30] sm:$0xf]
    %v138 = vld [vmem:[#allocation4 + $0x34] sm:$0xf]
    %v139 = vld [vmem:[#allocation4 + $0x38] sm:$0xf]
    %v140 = vld [vmem:[#allocation4 + $0x3c] sm:$0xf]
    %v141 = vld [vmem:[%s4] sm:$0x1]
    %v142 = vlaneseq
    %v143 = vshrl.u32 %v142, 7
    %v144 = vsub.s32 0, %v143
    %v145 = vrot.slane %v141, %v144
    %v162 = vunpack.c.l.b16 %v125
    %v163 = vunpack.c.l.b16 %v126
    %v164 = vunpack.c.l.b16 %v127
    %v165 = vunpack.c.l.b16 %v128
    %v166 = vunpack.c.l.b16 %v129
    %v167 = vunpack.c.l.b16 %v130
    %v168 = vunpack.c.l.b16 %v131
    %v169 = vunpack.c.l.b16 %v132
    %v170 = vunpack.c.l.b16 %v133
    %v171 = vunpack.c.l.b16 %v134
    %v172 = vunpack.c.l.b16 %v135
    %v173 = vunpack.c.l.b16 %v136
    %v174 = vunpack.c.l.b16 %v137
    %v175 = vunpack.c.l.b16 %v138
    %v176 = vunpack.c.l.b16 %v139
    %v177 = vunpack.c.l.b16 %v140
    %v178 = vpack.c.b16 %v163, %v162
    %v179 = vpack.c.b16 %v165, %v164
    %v180 = vpack.c.b16 %v167, %v166
    %v181 = vpack.c.b16 %v169, %v168
    %v182 = vpack.c.b16 %v171, %v170
    %v183 = vpack.c.b16 %v173, %v172
    %v184 = vpack.c.b16 %v175, %v174
    %v185 = vpack.c.b16 %v177, %v176
    %194 = vmatprep.subr.bf16.mxu0 0
    %195 = vmatpush1.bf16.msra.mxu0 %v178
    %196 = vmatprep.subr.bf16.mxu0 0
    %197 = vmatpush1.bf16.msra.mxu0 %v179
    %198 = vmatprep.subr.bf16.mxu0 0
    %199 = vmatpush1.bf16.msra.mxu0 %v180
    %200 = vmatprep.subr.bf16.mxu0 0
    %201 = vmatpush1.bf16.msra.mxu0 %v181
    %202 = vmatprep.subr.bf16.mxu0 0
    %203 = vmatpush1.bf16.msra.mxu0 %v182
    %204 = vmatprep.subr.bf16.mxu0 0
    %205 = vmatpush1.bf16.msra.mxu0 %v183
    %206 = vmatprep.subr.bf16.mxu0 0
    %207 = vmatpush1.bf16.msra.mxu0 %v184
    %208 = vmatprep.subr.bf16.mxu0 0
    %209 = vmatpush1.bf16.msra.mxu0 %v185
    %210 = vmatprep.subr.bf16.mxu0 0
    %211 = vmatpush1.bf16.msra.mxu0 0
    %212 = vmatprep.subr.bf16.mxu0 0
    %213 = vmatpush1.bf16.msra.mxu0 0
    %214 = vmatprep.subr.bf16.mxu0 0
    %215 = vmatpush1.bf16.msra.mxu0 0
    %216 = vmatprep.subr.bf16.mxu0 0
    %217 = vmatpush1.bf16.msra.mxu0 0
    %218 = vmatprep.subr.bf16.mxu0 0
    %219 = vmatpush1.bf16.msra.mxu0 0
    %220 = vmatprep.subr.bf16.mxu0 0
    %221 = vmatpush1.bf16.msra.mxu0 0
    %222 = vmatprep.subr.bf16.mxu0 0
    %223 = vmatpush1.bf16.msra.mxu0 0
    %224 = vmatprep.subr.bf16.mxu0 0
    %225 = vmatpush1.bf16.msra.mxu0 0
    %226 = vmatprep.mubr.bf16.mxu0 0
    %227 = vmatmul.mubr.bf16.gmra.mrb[0].mxu0 %v124
    %v228 = vpop.f32.mrb[0].mxu0
    %v229 = vadd.f32 %v145, %v228
    %v230 = vpop.f32.mrb[0].mxu0
    %v231 = vpop.f32.mrb[0].mxu0
    %v232 = vpop.f32.mrb[0].mxu0
    %233 = vdwg.mxu0
    %v234 = vmax.f32 %v229, 0.0
    %v235 = vpack.c.bf16 %v234, %v234
    %s236 = scalar_lea.vmem [#allocation4], 64
    %v237 = vld [vmem:[%s236] sm:$0xf]
    %v238 = vld [vmem:[%s236 + $0x4] sm:$0xf]
    %v239 = vld [vmem:[%s236 + $0x8] sm:$0xf]
    %v240 = vld [vmem:[%s236 + $0xc] sm:$0xf]
    %v241 = vld [vmem:[%s236 + $0x10] sm:$0xf]
    %v242 = vld [vmem:[%s236 + $0x14] sm:$0xf]
    %v243 = vld [vmem:[%s236 + $0x18] sm:$0xf]
    %v244 = vld [vmem:[%s236 + $0x1c] sm:$0xf]
    %v245 = vld [vmem:[%s236 + $0x20] sm:$0xf]
    %v246 = vld [vmem:[%s236 + $0x24] sm:$0xf]
    %v247 = vld [vmem:[%s236 + $0x28] sm:$0xf]
    %v248 = vld [vmem:[%s236 + $0x2c] sm:$0xf]
    %v249 = vld [vmem:[%s236 + $0x30] sm:$0xf]
    %v250 = vld [vmem:[%s236 + $0x34] sm:$0xf]
    %v251 = vld [vmem:[%s236 + $0x38] sm:$0xf]
    %v252 = vld [vmem:[%s236 + $0x3c] sm:$0xf]
    %v253 = vld [vmem:[%s4 + $0x1] sm:$0x1]
    %v254 = vlaneseq
    %v255 = vshrl.u32 %v254, 7
    %v256 = vsub.s32 0, %v255
    %v257 = vrot.slane %v253, %v256
    %v274 = vunpack.c.l.b16 %v237
    %v275 = vunpack.c.l.b16 %v238
    %v276 = vunpack.c.l.b16 %v239
    %v277 = vunpack.c.l.b16 %v240
    %v278 = vunpack.c.l.b16 %v241
    %v279 = vunpack.c.l.b16 %v242
    %v280 = vunpack.c.l.b16 %v243
    %v281 = vunpack.c.l.b16 %v244
    %v282 = vunpack.c.l.b16 %v245
    %v283 = vunpack.c.l.b16 %v246
    %v284 = vunpack.c.l.b16 %v247
    %v285 = vunpack.c.l.b16 %v248
    %v286 = vunpack.c.l.b16 %v249
    %v287 = vunpack.c.l.b16 %v250
    %v288 = vunpack.c.l.b16 %v251
    %v289 = vunpack.c.l.b16 %v252
    %v290 = vpack.c.b16 %v275, %v274
    %v291 = vpack.c.b16 %v277, %v276
    %v292 = vpack.c.b16 %v279, %v278
    %v293 = vpack.c.b16 %v281, %v280
    %v294 = vpack.c.b16 %v283, %v282
    %v295 = vpack.c.b16 %v285, %v284
    %v296 = vpack.c.b16 %v287, %v286
    %v297 = vpack.c.b16 %v289, %v288
    %306 = vmatprep.subr.bf16.mxu0 0
    %307 = vmatpush1.bf16.msra.mxu0 %v290
    %308 = vmatprep.subr.bf16.mxu0 0
    %309 = vmatpush1.bf16.msra.mxu0 %v291
    %310 = vmatprep.subr.bf16.mxu0 0
    %311 = vmatpush1.bf16.msra.mxu0 %v292
    %312 = vmatprep.subr.bf16.mxu0 0
    %313 = vmatpush1.bf16.msra.mxu0 %v293
    %314 = vmatprep.subr.bf16.mxu0 0
    %315 = vmatpush1.bf16.msra.mxu0 %v294
    %316 = vmatprep.subr.bf16.mxu0 0
    %317 = vmatpush1.bf16.msra.mxu0 %v295
    %318 = vmatprep.subr.bf16.mxu0 0
    %319 = vmatpush1.bf16.msra.mxu0 %v296
    %320 = vmatprep.subr.bf16.mxu0 0
    %321 = vmatpush1.bf16.msra.mxu0 %v297
    %322 = vmatprep.subr.bf16.mxu0 0
    %323 = vmatpush1.bf16.msra.mxu0 0
    %324 = vmatprep.subr.bf16.mxu0 0
    %325 = vmatpush1.bf16.msra.mxu0 0
    %326 = vmatprep.subr.bf16.mxu0 0
    %327 = vmatpush1.bf16.msra.mxu0 0
    %328 = vmatprep.subr.bf16.mxu0 0
    %329 = vmatpush1.bf16.msra.mxu0 0
    %330 = vmatprep.subr.bf16.mxu0 0
    %331 = vmatpush1.bf16.msra.mxu0 0
    %332 = vmatprep.subr.bf16.mxu0 0
    %333 = vmatpush1.bf16.msra.mxu0 0
    %334 = vmatprep.subr.bf16.mxu0 0
    %335 = vmatpush1.bf16.msra.mxu0 0
    %336 = vmatprep.subr.bf16.mxu0 0
    %337 = vmatpush1.bf16.msra.mxu0 0
    %338 = vmatprep.mubr.bf16.mxu0 0
    %339 = vmatmul.mubr.bf16.gmra.mrb[0].mxu0 %v235
    %v340 = vpop.f32.mrb[0].mxu0
    %v341 = vadd.f32 %v257, %v340
    %v342 = vpop.f32.mrb[0].mxu0
    %v343 = vpop.f32.mrb[0].mxu0
    %v344 = vpop.f32.mrb[0].mxu0
    %345 = vdwg.mxu0
    %v346 = vmax.f32 %v341, 0.0
    %v347 = vpack.c.bf16 %v346, %v346
    %s348 = scalar_lea.vmem [#allocation4], 128
    %v349 = vld [vmem:[%s348] sm:$0xf]
    %v350 = vld [vmem:[%s348 + $0x4] sm:$0xf]
    %v351 = vld [vmem:[%s348 + $0x8] sm:$0xf]
    %v352 = vld [vmem:[%s348 + $0xc] sm:$0xf]
    %v353 = vld [vmem:[%s348 + $0x10] sm:$0xf]
    %v354 = vld [vmem:[%s348 + $0x14] sm:$0xf]
    %v355 = vld [vmem:[%s348 + $0x18] sm:$0xf]
    %v356 = vld [vmem:[%s348 + $0x1c] sm:$0xf]
    %v357 = vld [vmem:[%s348 + $0x20] sm:$0xf]
    %v358 = vld [vmem:[%s348 + $0x24] sm:$0xf]
    %v359 = vld [vmem:[%s348 + $0x28] sm:$0xf]
    %v360 = vld [vmem:[%s348 + $0x2c] sm:$0xf]
    %v361 = vld [vmem:[%s348 + $0x30] sm:$0xf]
    %v362 = vld [vmem:[%s348 + $0x34] sm:$0xf]
    %v363 = vld [vmem:[%s348 + $0x38] sm:$0xf]
    %v364 = vld [vmem:[%s348 + $0x3c] sm:$0xf]
    %v365 = vld [vmem:[%s4 + $0x2] sm:$0x1]
    %v366 = vlaneseq
    %v367 = vshrl.u32 %v366, 7
    %v368 = vsub.s32 0, %v367
    %v369 = vrot.slane %v365, %v368
    %v386 = vunpack.c.l.b16 %v349
    %v387 = vunpack.c.l.b16 %v350
    %v388 = vunpack.c.l.b16 %v351
    %v389 = vunpack.c.l.b16 %v352
    %v390 = vunpack.c.l.b16 %v353
    %v391 = vunpack.c.l.b16 %v354
    %v392 = vunpack.c.l.b16 %v355
    %v393 = vunpack.c.l.b16 %v356
    %v394 = vunpack.c.l.b16 %v357
    %v395 = vunpack.c.l.b16 %v358
    %v396 = vunpack.c.l.b16 %v359
    %v397 = vunpack.c.l.b16 %v360
    %v398 = vunpack.c.l.b16 %v361
    %v399 = vunpack.c.l.b16 %v362
    %v400 = vunpack.c.l.b16 %v363
    %v401 = vunpack.c.l.b16 %v364
    %v402 = vpack.c.b16 %v387, %v386
    %v403 = vpack.c.b16 %v389, %v388
    %v404 = vpack.c.b16 %v391, %v390
    %v405 = vpack.c.b16 %v393, %v392
    %v406 = vpack.c.b16 %v395, %v394
    %v407 = vpack.c.b16 %v397, %v396
    %v408 = vpack.c.b16 %v399, %v398
    %v409 = vpack.c.b16 %v401, %v400
    %418 = vmatprep.subr.bf16.mxu0 0
    %419 = vmatpush1.bf16.msra.mxu0 %v402
    %420 = vmatprep.subr.bf16.mxu0 0
    %421 = vmatpush1.bf16.msra.mxu0 %v403
    %422 = vmatprep.subr.bf16.mxu0 0
    %423 = vmatpush1.bf16.msra.mxu0 %v404
    %424 = vmatprep.subr.bf16.mxu0 0
    %425 = vmatpush1.bf16.msra.mxu0 %v405
    %426 = vmatprep.subr.bf16.mxu0 0
    %427 = vmatpush1.bf16.msra.mxu0 %v406
    %428 = vmatprep.subr.bf16.mxu0 0
    %429 = vmatpush1.bf16.msra.mxu0 %v407
    %430 = vmatprep.subr.bf16.mxu0 0
    %431 = vmatpush1.bf16.msra.mxu0 %v408
    %432 = vmatprep.subr.bf16.mxu0 0
    %433 = vmatpush1.bf16.msra.mxu0 %v409
    %434 = vmatprep.subr.bf16.mxu0 0
    %435 = vmatpush1.bf16.msra.mxu0 0
    %436 = vmatprep.subr.bf16.mxu0 0
    %437 = vmatpush1.bf16.msra.mxu0 0
    %438 = vmatprep.subr.bf16.mxu0 0
    %439 = vmatpush1.bf16.msra.mxu0 0
    %440 = vmatprep.subr.bf16.mxu0 0
    %441 = vmatpush1.bf16.msra.mxu0 0
    %442 = vmatprep.subr.bf16.mxu0 0
    %443 = vmatpush1.bf16.msra.mxu0 0
    %444 = vmatprep.subr.bf16.mxu0 0
    %445 = vmatpush1.bf16.msra.mxu0 0
    %446 = vmatprep.subr.bf16.mxu0 0
    %447 = vmatpush1.bf16.msra.mxu0 0
    %448 = vmatprep.subr.bf16.mxu0 0
    %449 = vmatpush1.bf16.msra.mxu0 0
    %450 = vmatprep.mubr.bf16.mxu0 0
    %451 = vmatmul.mubr.bf16.gmra.mrb[0].mxu0 %v347
    %v452 = vpop.f32.mrb[0].mxu0
    %v453 = vadd.f32 %v369, %v452
    %v454 = vpop.f32.mrb[0].mxu0
    %v455 = vpop.f32.mrb[0].mxu0
    %v456 = vpop.f32.mrb[0].mxu0
    %457 = vdwg.mxu0
    %v458 = vmax.f32 %v453, 0.0
    %v459 = vpack.c.bf16 %v458, %v458
    %s460 = scalar_lea.vmem [#allocation4], 192
    %v461 = vld [vmem:[%s460] sm:$0xf]
    %v462 = vld [vmem:[%s460 + $0x4] sm:$0xf]
    %v463 = vld [vmem:[%s460 + $0x8] sm:$0xf]
    %v464 = vld [vmem:[%s460 + $0xc] sm:$0xf]
    %v465 = vld [vmem:[%s460 + $0x10] sm:$0xf]
    %v466 = vld [vmem:[%s460 + $0x14] sm:$0xf]
    %v467 = vld [vmem:[%s460 + $0x18] sm:$0xf]
    %v468 = vld [vmem:[%s460 + $0x1c] sm:$0xf]
    %v469 = vld [vmem:[%s460 + $0x20] sm:$0xf]
    %v470 = vld [vmem:[%s460 + $0x24] sm:$0xf]
    %v471 = vld [vmem:[%s460 + $0x28] sm:$0xf]
    %v472 = vld [vmem:[%s460 + $0x2c] sm:$0xf]
    %v473 = vld [vmem:[%s460 + $0x30] sm:$0xf]
    %v474 = vld [vmem:[%s460 + $0x34] sm:$0xf]
    %v475 = vld [vmem:[%s460 + $0x38] sm:$0xf]
    %v476 = vld [vmem:[%s460 + $0x3c] sm:$0xf]
    %v477 = vld [vmem:[%s4 + $0x3] sm:$0x1]
    %v478 = vlaneseq
    %v479 = vshrl.u32 %v478, 7
    %v480 = vsub.s32 0, %v479
    %v481 = vrot.slane %v477, %v480
    %v498 = vunpack.c.l.b16 %v461
    %v499 = vunpack.c.l.b16 %v462
    %v500 = vunpack.c.l.b16 %v463
    %v501 = vunpack.c.l.b16 %v464
    %v502 = vunpack.c.l.b16 %v465
    %v503 = vunpack.c.l.b16 %v466
    %v504 = vunpack.c.l.b16 %v467
    %v505 = vunpack.c.l.b16 %v468
    %v506 = vunpack.c.l.b16 %v469
    %v507 = vunpack.c.l.b16 %v470
    %v508 = vunpack.c.l.b16 %v471
    %v509 = vunpack.c.l.b16 %v472
    %v510 = vunpack.c.l.b16 %v473
    %v511 = vunpack.c.l.b16 %v474
    %v512 = vunpack.c.l.b16 %v475
    %v513 = vunpack.c.l.b16 %v476
    %v514 = vpack.c.b16 %v499, %v498
    %v515 = vpack.c.b16 %v501, %v500
    %v516 = vpack.c.b16 %v503, %v502
    %v517 = vpack.c.b16 %v505, %v504
    %v518 = vpack.c.b16 %v507, %v506
    %v519 = vpack.c.b16 %v509, %v508
    %v520 = vpack.c.b16 %v511, %v510
    %v521 = vpack.c.b16 %v513, %v512
    %530 = vmatprep.subr.bf16.mxu0 0
    %531 = vmatpush1.bf16.msra.mxu0 %v514
    %532 = vmatprep.subr.bf16.mxu0 0
    %533 = vmatpush1.bf16.msra.mxu0 %v515
    %534 = vmatprep.subr.bf16.mxu0 0
    %535 = vmatpush1.bf16.msra.mxu0 %v516
    %536 = vmatprep.subr.bf16.mxu0 0
    %537 = vmatpush1.bf16.msra.mxu0 %v517
    %538 = vmatprep.subr.bf16.mxu0 0
    %539 = vmatpush1.bf16.msra.mxu0 %v518
    %540 = vmatprep.subr.bf16.mxu0 0
    %541 = vmatpush1.bf16.msra.mxu0 %v519
    %542 = vmatprep.subr.bf16.mxu0 0
    %543 = vmatpush1.bf16.msra.mxu0 %v520
    %544 = vmatprep.subr.bf16.mxu0 0
    %545 = vmatpush1.bf16.msra.mxu0 %v521
    %546 = vmatprep.subr.bf16.mxu0 0
    %547 = vmatpush1.bf16.msra.mxu0 0
    %548 = vmatprep.subr.bf16.mxu0 0
    %549 = vmatpush1.bf16.msra.mxu0 0
    %550 = vmatprep.subr.bf16.mxu0 0
    %551 = vmatpush1.bf16.msra.mxu0 0
    %552 = vmatprep.subr.bf16.mxu0 0
    %553 = vmatpush1.bf16.msra.mxu0 0
    %554 = vmatprep.subr.bf16.mxu0 0
    %555 = vmatpush1.bf16.msra.mxu0 0
    %556 = vmatprep.subr.bf16.mxu0 0
    %557 = vmatpush1.bf16.msra.mxu0 0
    %558 = vmatprep.subr.bf16.mxu0 0
    %559 = vmatpush1.bf16.msra.mxu0 0
    %560 = vmatprep.subr.bf16.mxu0 0
    %561 = vmatpush1.bf16.msra.mxu0 0
    %562 = vmatprep.mubr.bf16.mxu0 0
    %563 = vmatmul.mubr.bf16.gmra.mrb[0].mxu0 %v459
    %v564 = vpop.f32.mrb[0].mxu0
    %v565 = vadd.f32 %v481, %v564
    %v566 = vpop.f32.mrb[0].mxu0
    %v567 = vpop.f32.mrb[0].mxu0
    %v568 = vpop.f32.mrb[0].mxu0
    %569 = vdwg.mxu0
    %v570 = vmax.f32 %v565, 0.0
    %v571 = vpack.c.bf16 %v570, %v570
    %v572 = vld [vmem:[%s5] sm:$0xf]
    %v573 = vld [vmem:[%s5 + $0x4] sm:$0xf]
    %v574 = vld [vmem:[%s5 + $0x8] sm:$0xf]
    %v575 = vld [vmem:[%s5 + $0xc] sm:$0xf]
    %v576 = vld [vmem:[%s5 + $0x10] sm:$0xf]
    %v577 = vld [vmem:[%s5 + $0x14] sm:$0xf]
    %v578 = vld [vmem:[%s5 + $0x18] sm:$0xf]
    %v579 = vld [vmem:[%s5 + $0x1c] sm:$0xf]
    %v580 = vld [vmem:[%s5 + $0x20] sm:$0xf]
    %v581 = vld [vmem:[%s5 + $0x24] sm:$0xf]
    %v582 = vld [vmem:[%s5 + $0x28] sm:$0xf]
    %v583 = vld [vmem:[%s5 + $0x2c] sm:$0xf]
    %v584 = vld [vmem:[%s5 + $0x30] sm:$0xf]
    %v585 = vld [vmem:[%s5 + $0x34] sm:$0xf]
    %v586 = vld [vmem:[%s5 + $0x38] sm:$0xf]
    %v587 = vld [vmem:[%s5 + $0x3c] sm:$0xf]
    %v588 = vld [vmem:[%s6] sm:$0x1]
    %v590 = vlaneseq
    %v591 = vshrl.u32 %v590, 7
    %v592 = vsub.s32 0, %v591
    %v593 = vrot.slane %v588, %v592
    %v611 = vunpack.c.l.b16 %v572
    %v612 = vunpack.c.l.b16 %v573
    %v613 = vunpack.c.l.b16 %v574
    %v614 = vunpack.c.l.b16 %v575
    %v615 = vunpack.c.l.b16 %v576
    %v616 = vunpack.c.l.b16 %v577
    %v617 = vunpack.c.l.b16 %v578
    %v618 = vunpack.c.l.b16 %v579
    %v619 = vunpack.c.l.b16 %v580
    %v620 = vunpack.c.l.b16 %v581
    %v621 = vunpack.c.l.b16 %v582
    %v622 = vunpack.c.l.b16 %v583
    %v623 = vunpack.c.l.b16 %v584
    %v624 = vunpack.c.l.b16 %v585
    %v625 = vunpack.c.l.b16 %v586
    %v626 = vunpack.c.l.b16 %v587
    %v627 = vpack.c.b16 %v612, %v611
    %v628 = vpack.c.b16 %v614, %v613
    %v629 = vpack.c.b16 %v616, %v615
    %v630 = vpack.c.b16 %v618, %v617
    %v631 = vpack.c.b16 %v620, %v619
    %v632 = vpack.c.b16 %v622, %v621
    %v633 = vpack.c.b16 %v624, %v623
    %v634 = vpack.c.b16 %v626, %v625
    %643 = vmatprep.subr.bf16.mxu0 0
    %644 = vmatpush1.bf16.msra.mxu0 %v627
    %645 = vmatprep.subr.bf16.mxu0 0
    %646 = vmatpush1.bf16.msra.mxu0 %v628
    %647 = vmatprep.subr.bf16.mxu0 0
    %648 = vmatpush1.bf16.msra.mxu0 %v629
    %649 = vmatprep.subr.bf16.mxu0 0
    %650 = vmatpush1.bf16.msra.mxu0 %v630
    %651 = vmatprep.subr.bf16.mxu0 0
    %652 = vmatpush1.bf16.msra.mxu0 %v631
    %653 = vmatprep.subr.bf16.mxu0 0
    %654 = vmatpush1.bf16.msra.mxu0 %v632
    %655 = vmatprep.subr.bf16.mxu0 0
    %656 = vmatpush1.bf16.msra.mxu0 %v633
    %657 = vmatprep.subr.bf16.mxu0 0
    %658 = vmatpush1.bf16.msra.mxu0 %v634
    %659 = vmatprep.subr.bf16.mxu0 0
    %660 = vmatpush1.bf16.msra.mxu0 0
    %661 = vmatprep.subr.bf16.mxu0 0
    %662 = vmatpush1.bf16.msra.mxu0 0
    %663 = vmatprep.subr.bf16.mxu0 0
    %664 = vmatpush1.bf16.msra.mxu0 0
    %665 = vmatprep.subr.bf16.mxu0 0
    %666 = vmatpush1.bf16.msra.mxu0 0
    %667 = vmatprep.subr.bf16.mxu0 0
    %668 = vmatpush1.bf16.msra.mxu0 0
    %669 = vmatprep.subr.bf16.mxu0 0
    %670 = vmatpush1.bf16.msra.mxu0 0
    %671 = vmatprep.subr.bf16.mxu0 0
    %672 = vmatpush1.bf16.msra.mxu0 0
    %673 = vmatprep.subr.bf16.mxu0 0
    %674 = vmatpush1.bf16.msra.mxu0 0
    %675 = vmatprep.mubr.bf16.mxu0 0
    %676 = vmatmul.mubr.bf16.gmra.mrb[0].mxu0 %v571
    %v677 = vpop.f32.mrb[0].mxu0
    %v678 = vadd.f32 %v593, %v677
    %v679 = vpop.f32.mrb[0].mxu0
    %v680 = vpop.f32.mrb[0].mxu0
    %v681 = vpop.f32.mrb[0].mxu0
    %682 = vdwg.mxu0
    %vm683 = vcmask 31744
    %684 = vst.msk [vmem:[%s7] sm:$0xff] %vm683, %v678
    // Predicated region
    $region38: #{forward.1} parent=1 // pred_check
      _
    $region39: #{forward.1} parent=1 // pred_check_branch
      %686 = sbr.rel (0) target = $region41
    $region40: #{forward.1} parent=1 // pred_region
      _
    $region41: #{forward.1} parent=1 // pred_fallthru
      _
    // Predicated region
    $region42: #{forward.1} parent=1 // pred_check
      _
    $region43: #{forward.1} parent=1 // pred_check_branch
      %688 = sbr.rel (0) target = $region45
    $region44: #{forward.1} parent=1 // pred_region
      _
    $region45: #{forward.1} parent=1 // pred_fallthru
      _
    %689 = vsyncpa [#allocation3], 1
    %690 = vsyncpa [#allocation5], 1

</llo_original>
